<compile_context>
chip_gen: v5e
topology: v5e:2x2
jax: 0.10.0
libtpu: 0.0.40
codegen_flags: <defaults>
</compile_context>

<pallas_src>
import functools

import jax
import jax.numpy as jnp
from jax.experimental import pallas as pl
from jax.experimental.pallas import tpu as pltpu

F32 = jnp.float32


# ----------------------------------------------------------------------------
# Pallas kernel: fused AdaptiveAvgPool2d(1) + 1x1 conv + BN + ReLU
#                + 1x1 conv + BN + sigmoid, one batch element per grid step.
# ----------------------------------------------------------------------------
def _view_attention_kernel(x_ref, w1_ref, s1_ref, t1_ref,
                           w2_ref, s2_ref, t2_ref, o_ref, *, C, inv_hw):
    # x_ref:  (1, C, HW, MM)   one batch element, spatial flattened
    # w1_ref: (C, MM, HID)     conv1 weight, PyTorch channel order c*MM + vu
    # s1/t1:  (1, HID)         folded conv1-bias + BN1 (eval mode) affine
    # w2_ref: (HID, MM)        conv2 weight
    # s2/t2:  (1, MM)          folded conv2-bias + BN2 (eval mode) affine
    # o_ref:  (1, 1, MM)
    hid = w1_ref.shape[-1]

    # Fused global-average-pool + first 1x1 conv:
    #   h[j] = sum_{c,vu} mean_hw(x[c,:,vu]) * w1[c,vu,j]
    h = jnp.zeros((1, hid), F32)
    for c in range(C):  # C is small & static; pooled slice stays tiny
        pooled_c = jnp.sum(x_ref[0, c], axis=0, keepdims=True) * inv_hw  # (1, MM)
        h = h + jnp.dot(pooled_c, w1_ref[c], preferred_element_type=F32)

    # conv1 bias + BatchNorm(64) + ReLU (folded affine epilogue)
    h = jnp.maximum(h * s1_ref[...] + t1_ref[...], 0.0)

    # second 1x1 conv + conv2 bias + BatchNorm(MM)
    y = jnp.dot(h, w2_ref[...], preferred_element_type=F32)
    y = y * s2_ref[...] + t2_ref[...]

    # numerically stable sigmoid (no inf intermediates)
    e = jnp.exp(-jnp.abs(y))
    o_ref[0] = jnp.where(y >= 0.0, 1.0 / (1.0 + e), e / (1.0 + e))


def view_attention_forward(x, params):
    """x: (B, C, H, W, MM) float32 -> wei: (B, 1, 1, 1, MM) float32."""
    B, C, H, W, MM = x.shape
    hid = params["w1"].shape[-1]
    HW = H * W
    x4 = x.reshape(B, C, HW, MM).astype(F32)  # free reshape (contiguous dims)

    out = pl.pallas_call(
        functools.partial(_view_attention_kernel, C=C, inv_hw=1.0 / float(HW)),
        out_shape=jax.ShapeDtypeStruct((B, 1, MM), F32),
        grid=(B,),
        in_specs=[
            pl.BlockSpec((1, C, HW, MM), lambda b: (b, 0, 0, 0)),
            pl.BlockSpec((C, MM, hid), lambda b: (0, 0, 0)),
            pl.BlockSpec((1, hid), lambda b: (0, 0)),
            pl.BlockSpec((1, hid), lambda b: (0, 0)),
            pl.BlockSpec((hid, MM), lambda b: (0, 0)),
            pl.BlockSpec((1, MM), lambda b: (0, 0)),
            pl.BlockSpec((1, MM), lambda b: (0, 0)),
        ],
        out_specs=pl.BlockSpec((1, 1, MM), lambda b: (b, 0, 0)),
        compiler_params=pltpu.CompilerParams(
            dimension_semantics=("parallel",)),  # megacore split on v7x
    )(x4, params["w1"], params["s1"], params["t1"],
      params["w2"], params["s2"], params["t2"])

    return out.reshape(B, 1, 1, 1, MM)


# ----------------------------------------------------------------------------
# Parameters: deterministic synthetic init, conv-bias + eval-mode BN folded
# into per-channel (scale, shift).
# ----------------------------------------------------------------------------
def init_view_attention_params(input_dim, n_views=9, hidden=64, seed=0):
    MM = n_views * n_views
    cin1 = input_dim * MM
    ks = jax.random.split(jax.random.PRNGKey(seed), 8)

    w1 = jax.random.normal(ks[0], (cin1, hidden), F32) / jnp.sqrt(float(cin1))
    b1 = 0.05 * jax.random.normal(ks[1], (hidden,), F32)
    g1 = 1.0 + 0.1 * jax.random.normal(ks[2], (hidden,), F32)
    be1 = 0.1 * jax.random.normal(ks[3], (hidden,), F32)

    w2 = jax.random.normal(ks[4], (hidden, MM), F32) / jnp.sqrt(float(hidden))
    b2 = 0.05 * jax.random.normal(ks[5], (MM,), F32)
    g2 = 1.0 + 0.1 * jax.random.normal(ks[6], (MM,), F32)
    be2 = 0.1 * jax.random.normal(ks[7], (MM,), F32)

    eps = 1e-5  # eval-mode BN: running_mean = 0, running_var = 1
    s1 = g1 / jnp.sqrt(1.0 + eps)
    t1 = be1 + b1 * s1
    s2 = g2 / jnp.sqrt(1.0 + eps)
    t2 = be2 + b2 * s2

    return {
        "w1": w1.reshape(input_dim, MM, hidden),  # channel order c*MM + vu
        "s1": s1.reshape(1, hidden), "t1": t1.reshape(1, hidden),
        "w2": w2,
        "s2": s2.reshape(1, MM), "t2": t2.reshape(1, MM),
    }


# ----------------------------------------------------------------------------
# Pure-JAX reference (same math, un-fused) for a correctness check.
# ----------------------------------------------------------------------------
def view_attention_reference(x, params):
    B, C, H, W, MM = x.shape
    hid = params["w1"].shape[-1]
    pooled = jnp.mean(x.astype(F32), axis=(2, 3))          # (B, C, MM)
    v = pooled.reshape(B, C * MM)                          # channel = c*MM + vu
    h = jnp.maximum(v @ params["w1"].reshape(C * MM, hid)
                    * params["s1"] + params["t1"], 0.0)
    y = h @ params["w2"] * params["s2"] + params["t2"]
    return jax.nn.sigmoid(y).reshape(B, 1, 1, 1, MM)


# ----------------------------------------------------------------------------
if __name__ == "__main__":
    B = 2            # batch
    input_dim = 4    # per-view channels C
    H = W = 16       # spatial
    n_views = 9      # module default -> MM = 81
    MM = n_views * n_views

    kx, _ = jax.random.split(jax.random.PRNGKey(0))
    x = jax.random.normal(kx, (B, input_dim, H, W, MM), F32)

    params = init_view_attention_params(input_dim, n_views=n_views, seed=0)

    fwd = jax.jit(view_attention_forward)
    wei = fwd(x, params)
    jax.block_until_ready(wei)

    assert wei.shape == (B, 1, 1, 1, MM)
    assert bool(jnp.all(jnp.isfinite(wei)))

    ref = view_attention_reference(x, params)
    err = float(jnp.max(jnp.abs(wei - ref)))
    assert err < 5e-3, f"mismatch vs reference: {err}"

    print("KERNEL_OK")
</pallas_src>

<mosaic_0001>
module attributes {stable_mosaic.version = 11 : i64} {
  func.func @_view_attention_kernel(%arg0: i32, %arg1: memref<1x4x256x81xf32, #tpu.memory_space<vmem>>, %arg2: memref<4x81x64xf32, #tpu.memory_space<vmem>>, %arg3: memref<1x64xf32, #tpu.memory_space<vmem>>, %arg4: memref<1x64xf32, #tpu.memory_space<vmem>>, %arg5: memref<64x81xf32, #tpu.memory_space<vmem>>, %arg6: memref<1x81xf32, #tpu.memory_space<vmem>>, %arg7: memref<1x81xf32, #tpu.memory_space<vmem>>, %arg8: memref<1x1x81xf32, #tpu.memory_space<vmem>>) attributes {dimension_semantics = [#tpu.dimension_semantics<parallel>], iteration_bounds = array<i64: 2>, scalar_prefetch = 0 : i64, scratch_operands = 0 : i64, tpu.core_type = #tpu.core_type<tc>, window_params = [{transform_indices = @transform_0, window_bounds = array<i64: 1, 4, 256, 81>}, {pipeline_mode = #tpu.pipeline_mode<synchronous>, transform_indices = @transform_1, window_bounds = array<i64: 4, 81, 64>}, {pipeline_mode = #tpu.pipeline_mode<synchronous>, transform_indices = @transform_2, window_bounds = array<i64: 1, 64>}, {pipeline_mode = #tpu.pipeline_mode<synchronous>, transform_indices = @transform_3, window_bounds = array<i64: 1, 64>}, {pipeline_mode = #tpu.pipeline_mode<synchronous>, transform_indices = @transform_4, window_bounds = array<i64: 64, 81>}, {pipeline_mode = #tpu.pipeline_mode<synchronous>, transform_indices = @transform_5, window_bounds = array<i64: 1, 81>}, {pipeline_mode = #tpu.pipeline_mode<synchronous>, transform_indices = @transform_6, window_bounds = array<i64: 1, 81>}, {transform_indices = @transform_7, window_bounds = array<i64: 1, 1, 81>}]} {
    %cst = arith.constant 0.000000e+00 : f32
    %0 = vector.broadcast %cst : f32 to vector<1x64xf32>
    %c0 = arith.constant 0 : index
    %c0_0 = arith.constant 0 : index
    %c0_1 = arith.constant 0 : index
    %c0_2 = arith.constant 0 : index
    %1 = vector.load %arg1[%c0, %c0_0, %c0_1, %c0_2] : memref<1x4x256x81xf32, #tpu.memory_space<vmem>>, vector<1x1x256x81xf32>
    %2 = vector.shape_cast %1 : vector<1x1x256x81xf32> to vector<256x81xf32>
    %cst_3 = arith.constant dense<0.000000e+00> : vector<81xf32>
    %3 = vector.multi_reduction <add>, %2, %cst_3 [0] : vector<256x81xf32> to vector<81xf32>
    %4 = vector.shape_cast %3 : vector<81xf32> to vector<1x81xf32>
    %cst_4 = arith.constant 3.906250e-03 : f32
    %5 = vector.broadcast %cst_4 : f32 to vector<1x81xf32>
    %6 = arith.mulf %4, %5 : vector<1x81xf32>
    %c0_5 = arith.constant 0 : index
    %c0_6 = arith.constant 0 : index
    %c0_7 = arith.constant 0 : index
    %7 = vector.load %arg2[%c0_5, %c0_6, %c0_7] : memref<4x81x64xf32, #tpu.memory_space<vmem>>, vector<1x81x64xf32>
    %8 = vector.shape_cast %7 : vector<1x81x64xf32> to vector<81x64xf32>
    %cst_8 = arith.constant dense<0.000000e+00> : vector<1x64xf32>
    %9 = tpu.matmul %6, %8, %cst_8 {dimension_numbers = #tpu.dot_dimension_numbers<[1], [0], [0], [1], [0, 0, 1, 1], [], []>} : vector<1x81xf32>, vector<81x64xf32>, vector<1x64xf32> -> vector<1x64xf32>
    %10 = arith.addf %0, %9 : vector<1x64xf32>
    %c0_9 = arith.constant 0 : index
    %c1 = arith.constant 1 : index
    %c0_10 = arith.constant 0 : index
    %c0_11 = arith.constant 0 : index
    %11 = vector.load %arg1[%c0_9, %c1, %c0_10, %c0_11] : memref<1x4x256x81xf32, #tpu.memory_space<vmem>>, vector<1x1x256x81xf32>
    %12 = vector.shape_cast %11 : vector<1x1x256x81xf32> to vector<256x81xf32>
    %cst_12 = arith.constant dense<0.000000e+00> : vector<81xf32>
    %13 = vector.multi_reduction <add>, %12, %cst_12 [0] : vector<256x81xf32> to vector<81xf32>
    %14 = vector.shape_cast %13 : vector<81xf32> to vector<1x81xf32>
    %cst_13 = arith.constant 3.906250e-03 : f32
    %15 = vector.broadcast %cst_13 : f32 to vector<1x81xf32>
    %16 = arith.mulf %14, %15 : vector<1x81xf32>
    %c1_14 = arith.constant 1 : index
    %c0_15 = arith.constant 0 : index
    %c0_16 = arith.constant 0 : index
    %17 = vector.load %arg2[%c1_14, %c0_15, %c0_16] : memref<4x81x64xf32, #tpu.memory_space<vmem>>, vector<1x81x64xf32>
    %18 = vector.shape_cast %17 : vector<1x81x64xf32> to vector<81x64xf32>
    %cst_17 = arith.constant dense<0.000000e+00> : vector<1x64xf32>
    %19 = tpu.matmul %16, %18, %cst_17 {dimension_numbers = #tpu.dot_dimension_numbers<[1], [0], [0], [1], [0, 0, 1, 1], [], []>} : vector<1x81xf32>, vector<81x64xf32>, vector<1x64xf32> -> vector<1x64xf32>
    %20 = arith.addf %10, %19 : vector<1x64xf32>
    %c0_18 = arith.constant 0 : index
    %c2 = arith.constant 2 : index
    %c0_19 = arith.constant 0 : index
    %c0_20 = arith.constant 0 : index
    %21 = vector.load %arg1[%c0_18, %c2, %c0_19, %c0_20] : memref<1x4x256x81xf32, #tpu.memory_space<vmem>>, vector<1x1x256x81xf32>
    %22 = vector.shape_cast %21 : vector<1x1x256x81xf32> to vector<256x81xf32>
    %cst_21 = arith.constant dense<0.000000e+00> : vector<81xf32>
    %23 = vector.multi_reduction <add>, %22, %cst_21 [0] : vector<256x81xf32> to vector<81xf32>
    %24 = vector.shape_cast %23 : vector<81xf32> to vector<1x81xf32>
    %cst_22 = arith.constant 3.906250e-03 : f32
    %25 = vector.broadcast %cst_22 : f32 to vector<1x81xf32>
    %26 = arith.mulf %24, %25 : vector<1x81xf32>
    %c2_23 = arith.constant 2 : index
    %c0_24 = arith.constant 0 : index
    %c0_25 = arith.constant 0 : index
    %27 = vector.load %arg2[%c2_23, %c0_24, %c0_25] : memref<4x81x64xf32, #tpu.memory_space<vmem>>, vector<1x81x64xf32>
    %28 = vector.shape_cast %27 : vector<1x81x64xf32> to vector<81x64xf32>
    %cst_26 = arith.constant dense<0.000000e+00> : vector<1x64xf32>
    %29 = tpu.matmul %26, %28, %cst_26 {dimension_numbers = #tpu.dot_dimension_numbers<[1], [0], [0], [1], [0, 0, 1, 1], [], []>} : vector<1x81xf32>, vector<81x64xf32>, vector<1x64xf32> -> vector<1x64xf32>
    %30 = arith.addf %20, %29 : vector<1x64xf32>
    %c0_27 = arith.constant 0 : index
    %c3 = arith.constant 3 : index
    %c0_28 = arith.constant 0 : index
    %c0_29 = arith.constant 0 : index
    %31 = vector.load %arg1[%c0_27, %c3, %c0_28, %c0_29] : memref<1x4x256x81xf32, #tpu.memory_space<vmem>>, vector<1x1x256x81xf32>
    %32 = vector.shape_cast %31 : vector<1x1x256x81xf32> to vector<256x81xf32>
    %cst_30 = arith.constant dense<0.000000e+00> : vector<81xf32>
    %33 = vector.multi_reduction <add>, %32, %cst_30 [0] : vector<256x81xf32> to vector<81xf32>
    %34 = vector.shape_cast %33 : vector<81xf32> to vector<1x81xf32>
    %cst_31 = arith.constant 3.906250e-03 : f32
    %35 = vector.broadcast %cst_31 : f32 to vector<1x81xf32>
    %36 = arith.mulf %34, %35 : vector<1x81xf32>
    %c3_32 = arith.constant 3 : index
    %c0_33 = arith.constant 0 : index
    %c0_34 = arith.constant 0 : index
    %37 = vector.load %arg2[%c3_32, %c0_33, %c0_34] : memref<4x81x64xf32, #tpu.memory_space<vmem>>, vector<1x81x64xf32>
    %38 = vector.shape_cast %37 : vector<1x81x64xf32> to vector<81x64xf32>
    %cst_35 = arith.constant dense<0.000000e+00> : vector<1x64xf32>
    %39 = tpu.matmul %36, %38, %cst_35 {dimension_numbers = #tpu.dot_dimension_numbers<[1], [0], [0], [1], [0, 0, 1, 1], [], []>} : vector<1x81xf32>, vector<81x64xf32>, vector<1x64xf32> -> vector<1x64xf32>
    %40 = arith.addf %30, %39 : vector<1x64xf32>
    %c0_36 = arith.constant 0 : index
    %c0_37 = arith.constant 0 : index
    %41 = vector.load %arg3[%c0_36, %c0_37] : memref<1x64xf32, #tpu.memory_space<vmem>>, vector<1x64xf32>
    %42 = arith.mulf %40, %41 : vector<1x64xf32>
    %c0_38 = arith.constant 0 : index
    %c0_39 = arith.constant 0 : index
    %43 = vector.load %arg4[%c0_38, %c0_39] : memref<1x64xf32, #tpu.memory_space<vmem>>, vector<1x64xf32>
    %44 = arith.addf %42, %43 : vector<1x64xf32>
    %cst_40 = arith.constant 0.000000e+00 : f32
    %45 = vector.broadcast %cst_40 : f32 to vector<1x64xf32>
    %46 = arith.maximumf %44, %45 : vector<1x64xf32>
    %c0_41 = arith.constant 0 : index
    %c0_42 = arith.constant 0 : index
    %47 = vector.load %arg5[%c0_41, %c0_42] : memref<64x81xf32, #tpu.memory_space<vmem>>, vector<64x81xf32>
    %cst_43 = arith.constant dense<0.000000e+00> : vector<1x81xf32>
    %48 = tpu.matmul %46, %47, %cst_43 {dimension_numbers = #tpu.dot_dimension_numbers<[1], [0], [0], [1], [0, 0, 1, 1], [], []>} : vector<1x64xf32>, vector<64x81xf32>, vector<1x81xf32> -> vector<1x81xf32>
    %c0_44 = arith.constant 0 : index
    %c0_45 = arith.constant 0 : index
    %49 = vector.load %arg6[%c0_44, %c0_45] : memref<1x81xf32, #tpu.memory_space<vmem>>, vector<1x81xf32>
    %50 = arith.mulf %48, %49 : vector<1x81xf32>
    %c0_46 = arith.constant 0 : index
    %c0_47 = arith.constant 0 : index
    %51 = vector.load %arg7[%c0_46, %c0_47] : memref<1x81xf32, #tpu.memory_space<vmem>>, vector<1x81xf32>
    %52 = arith.addf %50, %51 : vector<1x81xf32>
    %53 = math.absf %52 : vector<1x81xf32>
    %cst_48 = arith.constant 0.000000e+00 : f32
    %54 = vector.broadcast %cst_48 : f32 to vector<1x81xf32>
    %55 = arith.subf %54, %53 : vector<1x81xf32>
    %56 = math.exp %55 : vector<1x81xf32>
    %cst_49 = arith.constant 0.000000e+00 : f32
    %57 = vector.broadcast %cst_49 : f32 to vector<1x81xf32>
    %58 = arith.cmpf oge, %52, %57 : vector<1x81xf32>
    %cst_50 = arith.constant 1.000000e+00 : f32
    %59 = vector.broadcast %cst_50 : f32 to vector<1x81xf32>
    %60 = arith.addf %59, %56 : vector<1x81xf32>
    %cst_51 = arith.constant 1.000000e+00 : f32
    %61 = vector.broadcast %cst_51 : f32 to vector<1x81xf32>
    %62 = arith.divf %61, %60 : vector<1x81xf32>
    %cst_52 = arith.constant 1.000000e+00 : f32
    %63 = vector.broadcast %cst_52 : f32 to vector<1x81xf32>
    %64 = arith.addf %63, %56 : vector<1x81xf32>
    %65 = arith.divf %56, %64 : vector<1x81xf32>
    %66 = arith.select %58, %62, %65 : vector<1x81xi1>, vector<1x81xf32>
    %c0_53 = arith.constant 0 : index
    %c0_54 = arith.constant 0 : index
    %c0_55 = arith.constant 0 : index
    %67 = vector.load %arg8[%c0_53, %c0_54, %c0_55] : memref<1x1x81xf32, #tpu.memory_space<vmem>>, vector<1x1x81xf32>
    %68 = vector.shape_cast %67 : vector<1x1x81xf32> to vector<1x81xf32>
    %69 = vector.shape_cast %66 : vector<1x81xf32> to vector<1x1x81xf32>
    tpu.vector_store %arg8[%c0_53, %c0_54, %c0_55], %69 {strides = array<i32>} : memref<1x1x81xf32, #tpu.memory_space<vmem>>, vector<1x1x81xf32>,
    return
  }
  func.func @transform_0(%arg0: i32) -> (i32, i32, i32, i32) {
    %c0_i32 = arith.constant 0 : i32
    %c0_i32_0 = arith.constant 0 : i32
    %c0_i32_1 = arith.constant 0 : i32
    %c0_i32_2 = arith.constant 0 : i32
    return %arg0, %c0_i32, %c0_i32_0, %c0_i32_1 : i32, i32, i32, i32
  }
  func.func @transform_1(%arg0: i32) -> (i32, i32, i32) {
    %c0_i32 = arith.constant 0 : i32
    %c0_i32_0 = arith.constant 0 : i32
    %c0_i32_1 = arith.constant 0 : i32
    %c0_i32_2 = arith.constant 0 : i32
    return %c0_i32, %c0_i32_0, %c0_i32_1 : i32, i32, i32
  }
  func.func @transform_2(%arg0: i32) -> (i32, i32) {
    %c0_i32 = arith.constant 0 : i32
    %c0_i32_0 = arith.constant 0 : i32
    %c0_i32_1 = arith.constant 0 : i32
    return %c0_i32, %c0_i32_0 : i32, i32
  }
  func.func @transform_3(%arg0: i32) -> (i32, i32) {
    %c0_i32 = arith.constant 0 : i32
    %c0_i32_0 = arith.constant 0 : i32
    %c0_i32_1 = arith.constant 0 : i32
    return %c0_i32, %c0_i32_0 : i32, i32
  }
  func.func @transform_4(%arg0: i32) -> (i32, i32) {
    %c0_i32 = arith.constant 0 : i32
    %c0_i32_0 = arith.constant 0 : i32
    %c0_i32_1 = arith.constant 0 : i32
    return %c0_i32, %c0_i32_0 : i32, i32
  }
  func.func @transform_5(%arg0: i32) -> (i32, i32) {
    %c0_i32 = arith.constant 0 : i32
    %c0_i32_0 = arith.constant 0 : i32
    %c0_i32_1 = arith.constant 0 : i32
    return %c0_i32, %c0_i32_0 : i32, i32
  }
  func.func @transform_6(%arg0: i32) -> (i32, i32) {
    %c0_i32 = arith.constant 0 : i32
    %c0_i32_0 = arith.constant 0 : i32
    %c0_i32_1 = arith.constant 0 : i32
    return %c0_i32, %c0_i32_0 : i32, i32
  }
  func.func @transform_7(%arg0: i32) -> (i32, i32, i32) {
    %c0_i32 = arith.constant 0 : i32
    %c0_i32_0 = arith.constant 0 : i32
    %c0_i32_1 = arith.constant 0 : i32
    return %arg0, %c0_i32, %c0_i32_0 : i32, i32, i32
  }
}

</mosaic_0001>

<llo_original>
// kernel: view_attention_forward.1
$region0: #{view_attention_forward.1}
  #allocation0 [shape = 'u32[]', space=smem, size = 0x4, offset = 0x4, fixed_abs, tag = 'smem constant byte address 0x4 - core index']
  #allocation1 [shape = 'u32[72,128]{1,0:T(1,128)}', space=vmem, size = 0x9000, scoped, tag = 'internal scratch']
  %s0 = inlined_call_operand.hbm [shape: f32[2,4,256,81], index: 0, kind: input, shape index: {}]
  %s1 = inlined_call_operand.vmem [shape: f32[4,81,64], index: 1, kind: input, shape index: {}]
  %s2 = inlined_call_operand.vmem [shape: f32[1,64], index: 2, kind: input, shape index: {}]
  %s3 = inlined_call_operand.vmem [shape: f32[1,64], index: 3, kind: input, shape index: {}]
  %s4 = inlined_call_operand.vmem [shape: f32[64,81], index: 4, kind: input, shape index: {}]
  %s5 = inlined_call_operand.vmem [shape: f32[1,81], index: 5, kind: input, shape index: {}]
  %s6 = inlined_call_operand.vmem [shape: f32[1,81], index: 6, kind: input, shape index: {}]
  %s7 = inlined_call_operand.hbm [shape: f32[2,1,81], index: 7, kind: output, shape index: {}]
  %s8 = sld [smem:[#allocation0]]
  $region65: #{view_attention_forward.1} parent=0
    _
  %s10 = ssub.s32 1, %s8
  %s11 = scalar_select 0, %s10, %s8
  $region1: #{view_attention_forward.1} parent=0
    #allocation2 [shape = 'u8[1048576]{0}', space=vmem, size = 0x100000, scoped, tag = 'input window, operand 0']
    #allocation3 [shape = 's32[2]{0}', space=sflag, size = 0x8, scoped, tag = 'scoped memory for view_attention_forward.1']
    #allocation4 [shape = 's32[2]{0}', space=sflag, size = 0x8, scoped, tag = 'scoped memory for view_attention_forward.1']
    #allocation5 [shape = 'u8[1024]{0}', space=vmem, size = 0x400, scoped, tag = 'output window, operand 0']
    %12 = vsyncpa [#allocation3], 0
    %s13 = scalar_lea.sflag [#allocation3], 1
    %14 = vsyncpa %s13, 0
    %15 = vsyncpa [#allocation4], 0
    %s16 = scalar_lea.sflag [#allocation4], 1
    %17 = vsyncpa %s16, 0
    loop: start=0, step=1, limit=4
    $region2: #{view_attention_forward.1} parent=1 // loop_pre_header
      _
    $region3: #{view_attention_forward.1} parent=1 // loop_header
      %s19 = sphi 0, %s23
      %p20 = scmp.ge.s32.totalorder %s19, 4
      %s29 = sphi 0, %s31
      %s32 = sphi 0, %s29
      %s33 = sphi 0, %s32
      %s49 = sphi 0, %s33
      %s53 = sphi 0, %s53
      %s55 = sphi 0, %s53
      %s56 = sphi 0, %s55
      %s70 = sphi 0, %s56
      %s74 = sphi 0, %s74
      %s76 = sphi 0, %s74
      %s77 = sphi 0, %s76
      %s91 = sphi 0, %s77
      %s95 = sphi 0, %s95
      %s97 = sphi 0, %s95
      %s98 = sphi 0, %s97
      %s112 = sphi 0, %s98
      %s116 = sphi 0, %s116
      %s118 = sphi 0, %s116
      %s119 = sphi 0, %s118
      %s133 = sphi 0, %s119
      %s137 = sphi 0, %s137
      %s139 = sphi 0, %s137
      %s140 = sphi 0, %s139
      %s154 = sphi 0, %s140
      %s158 = sphi 0, %s158
      %s160 = sphi 0, %s158
      %s161 = sphi 0, %s160
      %s175 = sphi 0, %s161
      %s181 = sphi 0, %s183
      %s184 = sphi 0, %s181
      %s185 = sphi 0, %s184
      %s201 = sphi 0, %s185
    $region4: #{view_attention_forward.1} parent=1 // loop_header_branch
      %22 = sbr.rel (%p20) target = $region8
    $region5: #{view_attention_forward.1} parent=1 // loop_body
      %s24 = ssub.s32 %s19, 1
      %s25 = ssub.s32 %s19, 2
      %s26 = sadd.s32 %s19, 1
      %s27 = ssub.s32 %s19, %s26
      %p28 = scmp.eq.s32.totalorder %s27, 0
      %s30 = sadd.s32 %s29, 1
      %s31 = scalar_select %p28, %s29, %s30
      %p34 = pneg %p28
      %p35 = scmp.eq.s32.totalorder %s19, 1
      %p36 = por %p34, %p35
      %p37 = scmp.ne.s32.totalorder %s29, %s32
      %p38 = scmp.eq.s32.totalorder %s19, 0
      %p39 = por %p37, %p38
      %p40 = scmp.ne.s32.totalorder %s29, %s32
      %p41 = scmp.eq.s32.totalorder %s24, 1
      %p42 = por %p40, %p41
      %p43 = scmp.ne.s32.totalorder %s32, %s33
      %p44 = scmp.eq.s32.totalorder %s24, 0
      %p45 = por %p43, %p44
      %p46 = scmp.ne.s32.totalorder %s32, %s33
      %p47 = scmp.eq.s32.totalorder %s25, 1
      %p48 = por %p46, %p47
      %p50 = scmp.ne.s32.totalorder %s33, %s49
      %p51 = scmp.eq.s32.totalorder %s25, 0
      %p52 = por %p50, %p51
      %s54 = sadd.s32 %s53, 1
      %p57 = scmp.eq.s32.totalorder %s19, 1
      %p58 = scmp.ne.s32.totalorder %s53, %s55
      %p59 = scmp.eq.s32.totalorder %s19, 0
      %p60 = por %p58, %p59
      %p61 = scmp.ne.s32.totalorder %s53, %s55
      %p62 = scmp.eq.s32.totalorder %s24, 1
      %p63 = por %p61, %p62
      %p64 = scmp.ne.s32.totalorder %s55, %s56
      %p65 = scmp.eq.s32.totalorder %s24, 0
      %p66 = por %p64, %p65
      %p67 = scmp.ne.s32.totalorder %s55, %s56
      %p68 = scmp.eq.s32.totalorder %s25, 1
      %p69 = por %p67, %p68
      %p71 = scmp.ne.s32.totalorder %s56, %s70
      %p72 = scmp.eq.s32.totalorder %s25, 0
      %p73 = por %p71, %p72
      %s75 = sadd.s32 %s74, 1
      %p78 = scmp.eq.s32.totalorder %s19, 1
      %p79 = scmp.ne.s32.totalorder %s74, %s76
      %p80 = scmp.eq.s32.totalorder %s19, 0
      %p81 = por %p79, %p80
      %p82 = scmp.ne.s32.totalorder %s74, %s76
      %p83 = scmp.eq.s32.totalorder %s24, 1
      %p84 = por %p82, %p83
      %p85 = scmp.ne.s32.totalorder %s76, %s77
      %p86 = scmp.eq.s32.totalorder %s24, 0
      %p87 = por %p85, %p86
      %p88 = scmp.ne.s32.totalorder %s76, %s77
      %p89 = scmp.eq.s32.totalorder %s25, 1
      %p90 = por %p88, %p89
      %p92 = scmp.ne.s32.totalorder %s77, %s91
      %p93 = scmp.eq.s32.totalorder %s25, 0
      %p94 = por %p92, %p93
      %s96 = sadd.s32 %s95, 1
      %p99 = scmp.eq.s32.totalorder %s19, 1
      %p100 = scmp.ne.s32.totalorder %s95, %s97
      %p101 = scmp.eq.s32.totalorder %s19, 0
      %p102 = por %p100, %p101
      %p103 = scmp.ne.s32.totalorder %s95, %s97
      %p104 = scmp.eq.s32.totalorder %s24, 1
      %p105 = por %p103, %p104
      %p106 = scmp.ne.s32.totalorder %s97, %s98
      %p107 = scmp.eq.s32.totalorder %s24, 0
      %p108 = por %p106, %p107
      %p109 = scmp.ne.s32.totalorder %s97, %s98
      %p110 = scmp.eq.s32.totalorder %s25, 1
      %p111 = por %p109, %p110
      %p113 = scmp.ne.s32.totalorder %s98, %s112
      %p114 = scmp.eq.s32.totalorder %s25, 0
      %p115 = por %p113, %p114
      %s117 = sadd.s32 %s116, 1
      %p120 = scmp.eq.s32.totalorder %s19, 1
      %p121 = scmp.ne.s32.totalorder %s116, %s118
      %p122 = scmp.eq.s32.totalorder %s19, 0
      %p123 = por %p121, %p122
      %p124 = scmp.ne.s32.totalorder %s116, %s118
      %p125 = scmp.eq.s32.totalorder %s24, 1
      %p126 = por %p124, %p125
      %p127 = scmp.ne.s32.totalorder %s118, %s119
      %p128 = scmp.eq.s32.totalorder %s24, 0
      %p129 = por %p127, %p128
      %p130 = scmp.ne.s32.totalorder %s118, %s119
      %p131 = scmp.eq.s32.totalorder %s25, 1
      %p132 = por %p130, %p131
      %p134 = scmp.ne.s32.totalorder %s119, %s133
      %p135 = scmp.eq.s32.totalorder %s25, 0
      %p136 = por %p134, %p135
      %s138 = sadd.s32 %s137, 1
      %p141 = scmp.eq.s32.totalorder %s19, 1
      %p142 = scmp.ne.s32.totalorder %s137, %s139
      %p143 = scmp.eq.s32.totalorder %s19, 0
      %p144 = por %p142, %p143
      %p145 = scmp.ne.s32.totalorder %s137, %s139
      %p146 = scmp.eq.s32.totalorder %s24, 1
      %p147 = por %p145, %p146
      %p148 = scmp.ne.s32.totalorder %s139, %s140
      %p149 = scmp.eq.s32.totalorder %s24, 0
      %p150 = por %p148, %p149
      %p151 = scmp.ne.s32.totalorder %s139, %s140
      %p152 = scmp.eq.s32.totalorder %s25, 1
      %p153 = por %p151, %p152
      %p155 = scmp.ne.s32.totalorder %s140, %s154
      %p156 = scmp.eq.s32.totalorder %s25, 0
      %p157 = por %p155, %p156
      %s159 = sadd.s32 %s158, 1
      %p162 = scmp.eq.s32.totalorder %s19, 1
      %p163 = scmp.ne.s32.totalorder %s158, %s160
      %p164 = scmp.eq.s32.totalorder %s19, 0
      %p165 = por %p163, %p164
      %p166 = scmp.ne.s32.totalorder %s158, %s160
      %p167 = scmp.eq.s32.totalorder %s24, 1
      %p168 = por %p166, %p167
      %p169 = scmp.ne.s32.totalorder %s160, %s161
      %p170 = scmp.eq.s32.totalorder %s24, 0
      %p171 = por %p169, %p170
      %p172 = scmp.ne.s32.totalorder %s160, %s161
      %p173 = scmp.eq.s32.totalorder %s25, 1
      %p174 = por %p172, %p173
      %p176 = scmp.ne.s32.totalorder %s161, %s175
      %p177 = scmp.eq.s32.totalorder %s25, 0
      %p178 = por %p176, %p177
      %s179 = ssub.s32 %s19, %s26
      %p180 = scmp.eq.s32.totalorder %s179, 0
      %s182 = sadd.s32 %s181, 1
      %s183 = scalar_select %p180, %s181, %s182
      %p186 = pneg %p180
      %p187 = scmp.eq.s32.totalorder %s19, 1
      %p188 = por %p186, %p187
      %p189 = scmp.ne.s32.totalorder %s181, %s184
      %p190 = scmp.eq.s32.totalorder %s19, 0
      %p191 = por %p189, %p190
      %p192 = scmp.ne.s32.totalorder %s181, %s184
      %p193 = scmp.eq.s32.totalorder %s24, 1
      %p194 = por %p192, %p193
      %p195 = scmp.ne.s32.totalorder %s184, %s185
      %p196 = scmp.eq.s32.totalorder %s24, 0
      %p197 = por %p195, %p196
      %p198 = scmp.ne.s32.totalorder %s184, %s185
      %p199 = scmp.eq.s32.totalorder %s25, 1
      %p200 = por %p198, %p199
      %p202 = scmp.ne.s32.totalorder %s185, %s201
      %p203 = scmp.eq.s32.totalorder %s25, 0
      %p204 = por %p202, %p203
      %p205 = scmp.le.s32.totalorder 1, %s19
      %p206 = scmp.lt.s32.totalorder %s19, 3
      %p207 = pnand %p205, %p206
      %p208 = pneg %p207
      // Predicated region
      $region9: #{view_attention_forward.1} parent=5 // pred_check
        _
      $region10: #{view_attention_forward.1} parent=5 // pred_check_branch
        %210 = sbr.rel (%p207) target = $region12
      $region11: #{view_attention_forward.1} parent=5 // pred_region
        %s211 = ssub.s32 %s19, 1
        // Predicated region
        $region13: #{view_attention_forward.1} parent=11 // pred_check
          %p212 = pneg %p66
        $region14: #{view_attention_forward.1} parent=11 // pred_check_branch
          %214 = sbr.rel (%p212) target = $region16
        $region15: #{view_attention_forward.1} parent=11 // pred_region
          _
        $region16: #{view_attention_forward.1} parent=11 // pred_fallthru
          _
        // Predicated region
        $region17: #{view_attention_forward.1} parent=11 // pred_check
          %p215 = pneg %p87
        $region18: #{view_attention_forward.1} parent=11 // pred_check_branch
          %217 = sbr.rel (%p215) target = $region20
        $region19: #{view_attention_forward.1} parent=11 // pred_region
          _
        $region20: #{view_attention_forward.1} parent=11 // pred_fallthru
          _
        // Predicated region
        $region21: #{view_attention_forward.1} parent=11 // pred_check
          %p218 = pneg %p108
        $region22: #{view_attention_forward.1} parent=11 // pred_check_branch
          %220 = sbr.rel (%p218) target = $region24
        $region23: #{view_attention_forward.1} parent=11 // pred_region
          _
        $region24: #{view_attention_forward.1} parent=11 // pred_fallthru
          _
        // Predicated region
        $region25: #{view_attention_forward.1} parent=11 // pred_check
          %p221 = pneg %p129
        $region26: #{view_attention_forward.1} parent=11 // pred_check_branch
          %223 = sbr.rel (%p221) target = $region28
        $region27: #{view_attention_forward.1} parent=11 // pred_region
          _
        $region28: #{view_attention_forward.1} parent=11 // pred_fallthru
          _
        // Predicated region
        $region29: #{view_attention_forward.1} parent=11 // pred_check
          %p224 = pneg %p150
        $region30: #{view_attention_forward.1} parent=11 // pred_check_branch
          %226 = sbr.rel (%p224) target = $region32
        $region31: #{view_attention_forward.1} parent=11 // pred_region
          _
        $region32: #{view_attention_forward.1} parent=11 // pred_fallthru
          _
        // Predicated region
        $region33: #{view_attention_forward.1} parent=11 // pred_check
          %p227 = pneg %p171
        $region34: #{view_attention_forward.1} parent=11 // pred_check_branch
          %229 = sbr.rel (%p227) target = $region36
        $region35: #{view_attention_forward.1} parent=11 // pred_region
          _
        $region36: #{view_attention_forward.1} parent=11 // pred_fallthru
          _
      $region12: #{view_attention_forward.1} parent=5 // pred_fallthru
        _
      %p230 = scmp.lt.s32.totalorder %s19, 2
      // Predicated region
      $region37: #{view_attention_forward.1} parent=5 // pred_check
        %p231 = pneg %p230
      $region38: #{view_attention_forward.1} parent=5 // pred_check_branch
        %233 = sbr.rel (%p231) target = $region40
      $region39: #{view_attention_forward.1} parent=5 // pred_region
        // Predicated region
        $region41: #{view_attention_forward.1} parent=39 // pred_check
          %p234 = pneg %p39
        $region42: #{view_attention_forward.1} parent=39 // pred_check_branch
          %236 = sbr.rel (%p234) target = $region44
        $region43: #{view_attention_forward.1} parent=39 // pred_region
          %s237 = sand.u32 %s29, 1
          %s238 = scalar_lea.sflag [#allocation3], %s237
          %s239 = sand.u32 %s29, 1
          %s240 = smul.addr %s239, 1024
          %s241 = scalar_lea.vmem [#allocation2], %s240
          %243 = vsyncadd %s238, 0
          %s244 = smul.addr %s19, 128
          %s245 = smul.addr %s244, 8
          %s246 = scalar_lea.hbm %s0, %s245
          %s247 = sshll.u32 %s246, 4
          %s248 = int_to_ptr.hbm [resolvable:$true] %s247
          %s249 = sshll.u32 %s241, 4
          %s250 = int_to_ptr.vmem [resolvable:$true] %s249
          %255 = dma.hbm_to_vmem [thread:$0]  %s248, 16384, %s250, %s238, 128, 128, 8
        $region44: #{view_attention_forward.1} parent=39 // pred_fallthru
          _
      $region40: #{view_attention_forward.1} parent=5 // pred_fallthru
        _
      %p256 = scmp.le.s32.totalorder 1, %s19
      %p257 = scmp.lt.s32.totalorder %s19, 3
      %p258 = pnand %p256, %p257
      %p259 = pneg %p258
      // Predicated region
      $region45: #{view_attention_forward.1} parent=5 // pred_check
        _
      $region46: #{view_attention_forward.1} parent=5 // pred_check_branch
        %261 = sbr.rel (%p258) target = $region48
      $region47: #{view_attention_forward.1} parent=5 // pred_region
        %s262 = ssub.s32 %s19, 1
        %s263 = sand.u32 %s32, 1
        %s264 = scalar_lea.sflag [#allocation3], %s263
        %s265 = sand.u32 %s32, 1
        %s266 = smul.addr %s265, 1024
        %s267 = scalar_lea.vmem [#allocation2], %s266
        // Predicated region
        $region49: #{view_attention_forward.1} parent=47 // pred_check
          %p268 = pneg %p45
        $region50: #{view_attention_forward.1} parent=47 // pred_check_branch
          %270 = sbr.rel (%p268) target = $region52
        $region51: #{view_attention_forward.1} parent=47 // pred_region
          %272 = dma.done %s264, 16384
        $region52: #{view_attention_forward.1} parent=47 // pred_fallthru
          _
        %s273 = sand.u32 %s32, 1
        %s274 = scalar_lea.sflag [#allocation3], %s273
        %s275 = sand.u32 %s32, 1
        %s276 = smul.addr %s275, 1024
        %s277 = scalar_lea.vmem [#allocation2], %s276
        %p278 = pneg %p45
        %p279 = pneg %p42
        %p280 = pneg %p66
        %p281 = pneg %p63
        %p282 = pneg %p87
        %p283 = pneg %p84
        %p284 = pneg %p108
        %p285 = pneg %p105
        %p286 = pneg %p129
        %p287 = pneg %p126
        %p288 = pneg %p150
        %p289 = pneg %p147
        %p290 = pneg %p171
        %p291 = pneg %p168
        %p292 = pneg %p197
        %p293 = pneg %p194
        %s294 = sand.u32 %s184, 1
        %s295 = scalar_lea.sflag [#allocation4], %s294
        %s296 = sand.u32 %s184, 1
        %s297 = scalar_lea.vmem [#allocation5], %s296
        %v298 = vld [vmem:[%s267] sm:$0xff]
        %v299 = vld [vmem:[%s267 + $0x8] sm:$0xff]
        %v300 = vld [vmem:[%s267 + $0x10] sm:$0xff]
        %v301 = vld [vmem:[%s267 + $0x18] sm:$0xff]
        %v302 = vld [vmem:[%s267 + $0x20] sm:$0xff]
        %v303 = vld [vmem:[%s267 + $0x28] sm:$0xff]
        %v304 = vld [vmem:[%s267 + $0x30] sm:$0xff]
        %v305 = vld [vmem:[%s267 + $0x38] sm:$0xff]
        %v306 = vld [vmem:[%s267 + $0x40] sm:$0xff]
        %v307 = vld [vmem:[%s267 + $0x48] sm:$0xff]
        %v308 = vld [vmem:[%s267 + $0x50] sm:$0xff]
        %v309 = vld [vmem:[%s267 + $0x58] sm:$0xff]
        %v310 = vld [vmem:[%s267 + $0x60] sm:$0xff]
        %v311 = vld [vmem:[%s267 + $0x68] sm:$0xff]
        %v312 = vld [vmem:[%s267 + $0x70] sm:$0xff]
        %v313 = vld [vmem:[%s267 + $0x78] sm:$0xff]
        %v314 = vld [vmem:[%s267 + $0x80] sm:$0xff]
        %v315 = vld [vmem:[%s267 + $0x88] sm:$0xff]
        %v316 = vld [vmem:[%s267 + $0x90] sm:$0xff]
        %v317 = vld [vmem:[%s267 + $0x98] sm:$0xff]
        %v318 = vld [vmem:[%s267 + $0xa0] sm:$0xff]
        %v319 = vld [vmem:[%s267 + $0xa8] sm:$0xff]
        %v320 = vld [vmem:[%s267 + $0xb0] sm:$0xff]
        %v321 = vld [vmem:[%s267 + $0xb8] sm:$0xff]
        %v322 = vld [vmem:[%s267 + $0xc0] sm:$0xff]
        %v323 = vld [vmem:[%s267 + $0xc8] sm:$0xff]
        %v324 = vld [vmem:[%s267 + $0xd0] sm:$0xff]
        %v325 = vld [vmem:[%s267 + $0xd8] sm:$0xff]
        %v326 = vld [vmem:[%s267 + $0xe0] sm:$0xff]
        %v327 = vld [vmem:[%s267 + $0xe8] sm:$0xff]
        %v328 = vld [vmem:[%s267 + $0xf0] sm:$0xff]
        %v329 = vld [vmem:[%s267 + $0xf8] sm:$0xff]
        %vm330 = vcmask 662528
        %v331 = vsel %vm330, %v298, 0.0
        %v332 = vsel %vm330, %v299, 0.0
        %v333 = vadd.f32 %v331, %v332
        %v334 = vsel %vm330, %v300, 0.0
        %v335 = vadd.f32 %v333, %v334
        %v336 = vsel %vm330, %v301, 0.0
        %v337 = vadd.f32 %v335, %v336
        %v338 = vsel %vm330, %v302, 0.0
        %v339 = vadd.f32 %v337, %v338
        %v340 = vsel %vm330, %v303, 0.0
        %v341 = vadd.f32 %v339, %v340
        %v342 = vsel %vm330, %v304, 0.0
        %v343 = vadd.f32 %v341, %v342
        %v344 = vsel %vm330, %v305, 0.0
        %v345 = vadd.f32 %v343, %v344
        %v346 = vsel %vm330, %v306, 0.0
        %v347 = vadd.f32 %v345, %v346
        %v348 = vsel %vm330, %v307, 0.0
        %v349 = vadd.f32 %v347, %v348
        %v350 = vsel %vm330, %v308, 0.0
        %v351 = vadd.f32 %v349, %v350
        %v352 = vsel %vm330, %v309, 0.0
        %v353 = vadd.f32 %v351, %v352
        %v354 = vsel %vm330, %v310, 0.0
        %v355 = vadd.f32 %v353, %v354
        %v356 = vsel %vm330, %v311, 0.0
        %v357 = vadd.f32 %v355, %v356
        %v358 = vsel %vm330, %v312, 0.0
        %v359 = vadd.f32 %v357, %v358
        %v360 = vsel %vm330, %v313, 0.0
        %v361 = vadd.f32 %v359, %v360
        %v362 = vsel %vm330, %v314, 0.0
        %v363 = vadd.f32 %v361, %v362
        %v364 = vsel %vm330, %v315, 0.0
        %v365 = vadd.f32 %v363, %v364
        %v366 = vsel %vm330, %v316, 0.0
        %v367 = vadd.f32 %v365, %v366
        %v368 = vsel %vm330, %v317, 0.0
        %v369 = vadd.f32 %v367, %v368
        %v370 = vsel %vm330, %v318, 0.0
        %v371 = vadd.f32 %v369, %v370
        %v372 = vsel %vm330, %v319, 0.0
        %v373 = vadd.f32 %v371, %v372
        %v374 = vsel %vm330, %v320, 0.0
        %v375 = vadd.f32 %v373, %v374
        %v376 = vsel %vm330, %v321, 0.0
        %v377 = vadd.f32 %v375, %v376
        %v378 = vsel %vm330, %v322, 0.0
        %v379 = vadd.f32 %v377, %v378
        %v380 = vsel %vm330, %v323, 0.0
        %v381 = vadd.f32 %v379, %v380
        %v382 = vsel %vm330, %v324, 0.0
        %v383 = vadd.f32 %v381, %v382
        %v384 = vsel %vm330, %v325, 0.0
        %v385 = vadd.f32 %v383, %v384
        %v386 = vsel %vm330, %v326, 0.0
        %v387 = vadd.f32 %v385, %v386
        %v388 = vsel %vm330, %v327, 0.0
        %v389 = vadd.f32 %v387, %v388
        %v390 = vsel %vm330, %v328, 0.0
        %v391 = vadd.f32 %v389, %v390
        %v392 = vsel %vm330, %v329, 0.0
        %v393 = vadd.f32 %v391, %v392
        %v394 = vrot.slane %v393, 4
        %v395 = vadd.f32 %v393, %v394
        %v396 = vrot.slane %v395, 2
        %v397 = vadd.f32 %v395, %v396
        %v398 = vrot.slane %v397, 1
        %v399 = vadd.f32 %v397, %v398
        %v400 = vmul.f32 %v399, 0.00390625
        %v401 = vld [vmem:[%s1] sm:$0xff]
        %v402 = vld [vmem:[%s1 + $0x8] sm:$0xff]
        %v403 = vld [vmem:[%s1 + $0x10] sm:$0xff]
        %v404 = vld [vmem:[%s1 + $0x18] sm:$0xff]
        %v405 = vld [vmem:[%s1 + $0x20] sm:$0xff]
        %v406 = vld [vmem:[%s1 + $0x28] sm:$0xff]
        %v407 = vld [vmem:[%s1 + $0x30] sm:$0xff]
        %v408 = vld [vmem:[%s1 + $0x38] sm:$0xff]
        %v409 = vld [vmem:[%s1 + $0x40] sm:$0xff]
        %v410 = vld [vmem:[%s1 + $0x48] sm:$0xff]
        %v411 = vld [vmem:[%s1 + $0x50] sm:$0x1]
        %s412 = scalar_lea.vmem %s267, 256 [#allocation2]
        %v413 = vld [vmem:[%s412] sm:$0xff]
        %v414 = vld [vmem:[%s412 + $0x8] sm:$0xff]
        %v415 = vld [vmem:[%s412 + $0x10] sm:$0xff]
        %v416 = vld [vmem:[%s412 + $0x18] sm:$0xff]
        %v417 = vld [vmem:[%s412 + $0x20] sm:$0xff]
        %v418 = vld [vmem:[%s412 + $0x28] sm:$0xff]
        %v419 = vld [vmem:[%s412 + $0x30] sm:$0xff]
        %v420 = vld [vmem:[%s412 + $0x38] sm:$0xff]
        %v421 = vld [vmem:[%s412 + $0x40] sm:$0xff]
        %v422 = vld [vmem:[%s412 + $0x48] sm:$0xff]
        %v423 = vld [vmem:[%s412 + $0x50] sm:$0xff]
        %v424 = vld [vmem:[%s412 + $0x58] sm:$0xff]
        %v425 = vld [vmem:[%s412 + $0x60] sm:$0xff]
        %v426 = vld [vmem:[%s412 + $0x68] sm:$0xff]
        %v427 = vld [vmem:[%s412 + $0x70] sm:$0xff]
        %v428 = vld [vmem:[%s412 + $0x78] sm:$0xff]
        %v429 = vld [vmem:[%s412 + $0x80] sm:$0xff]
        %v430 = vld [vmem:[%s412 + $0x88] sm:$0xff]
        %v431 = vld [vmem:[%s412 + $0x90] sm:$0xff]
        %v432 = vld [vmem:[%s412 + $0x98] sm:$0xff]
        %v433 = vld [vmem:[%s412 + $0xa0] sm:$0xff]
        %v434 = vld [vmem:[%s412 + $0xa8] sm:$0xff]
        %v435 = vld [vmem:[%s412 + $0xb0] sm:$0xff]
        %v436 = vld [vmem:[%s412 + $0xb8] sm:$0xff]
        %v437 = vld [vmem:[%s412 + $0xc0] sm:$0xff]
        %v438 = vld [vmem:[%s412 + $0xc8] sm:$0xff]
        %v439 = vld [vmem:[%s412 + $0xd0] sm:$0xff]
        %v440 = vld [vmem:[%s412 + $0xd8] sm:$0xff]
        %v441 = vld [vmem:[%s412 + $0xe0] sm:$0xff]
        %v442 = vld [vmem:[%s412 + $0xe8] sm:$0xff]
        %v443 = vld [vmem:[%s412 + $0xf0] sm:$0xff]
        %v444 = vld [vmem:[%s412 + $0xf8] sm:$0xff]
        %v445 = vsel %vm330, %v413, 0.0
        %v446 = vsel %vm330, %v414, 0.0
        %v447 = vadd.f32 %v445, %v446
        %v448 = vsel %vm330, %v415, 0.0
        %v449 = vadd.f32 %v447, %v448
        %v450 = vsel %vm330, %v416, 0.0
        %v451 = vadd.f32 %v449, %v450
        %v452 = vsel %vm330, %v417, 0.0
        %v453 = vadd.f32 %v451, %v452
        %v454 = vsel %vm330, %v418, 0.0
        %v455 = vadd.f32 %v453, %v454
        %v456 = vsel %vm330, %v419, 0.0
        %v457 = vadd.f32 %v455, %v456
        %v458 = vsel %vm330, %v420, 0.0
        %v459 = vadd.f32 %v457, %v458
        %v460 = vsel %vm330, %v421, 0.0
        %v461 = vadd.f32 %v459, %v460
        %v462 = vsel %vm330, %v422, 0.0
        %v463 = vadd.f32 %v461, %v462
        %v464 = vsel %vm330, %v423, 0.0
        %v465 = vadd.f32 %v463, %v464
        %v466 = vsel %vm330, %v424, 0.0
        %v467 = vadd.f32 %v465, %v466
        %v468 = vsel %vm330, %v425, 0.0
        %v469 = vadd.f32 %v467, %v468
        %v470 = vsel %vm330, %v426, 0.0
        %v471 = vadd.f32 %v469, %v470
        %v472 = vsel %vm330, %v427, 0.0
        %v473 = vadd.f32 %v471, %v472
        %v474 = vsel %vm330, %v428, 0.0
        %v475 = vadd.f32 %v473, %v474
        %v476 = vsel %vm330, %v429, 0.0
        %v477 = vadd.f32 %v475, %v476
        %v478 = vsel %vm330, %v430, 0.0
        %v479 = vadd.f32 %v477, %v478
        %v480 = vsel %vm330, %v431, 0.0
        %v481 = vadd.f32 %v479, %v480
        %v482 = vsel %vm330, %v432, 0.0
        %v483 = vadd.f32 %v481, %v482
        %v484 = vsel %vm330, %v433, 0.0
        %v485 = vadd.f32 %v483, %v484
        %v486 = vsel %vm330, %v434, 0.0
        %v487 = vadd.f32 %v485, %v486
        %v488 = vsel %vm330, %v435, 0.0
        %v489 = vadd.f32 %v487, %v488
        %v490 = vsel %vm330, %v436, 0.0
        %v491 = vadd.f32 %v489, %v490
        %v492 = vsel %vm330, %v437, 0.0
        %v493 = vadd.f32 %v491, %v492
        %v494 = vsel %vm330, %v438, 0.0
        %v495 = vadd.f32 %v493, %v494
        %v496 = vsel %vm330, %v439, 0.0
        %v497 = vadd.f32 %v495, %v496
        %v498 = vsel %vm330, %v440, 0.0
        %v499 = vadd.f32 %v497, %v498
        %v500 = vsel %vm330, %v441, 0.0
        %v501 = vadd.f32 %v499, %v500
        %v502 = vsel %vm330, %v442, 0.0
        %v503 = vadd.f32 %v501, %v502
        %v504 = vsel %vm330, %v443, 0.0
        %v505 = vadd.f32 %v503, %v504
        %v506 = vsel %vm330, %v444, 0.0
        %v507 = vadd.f32 %v505, %v506
        %v508 = vrot.slane %v507, 4
        %v509 = vadd.f32 %v507, %v508
        %v510 = vrot.slane %v509, 2
        %v511 = vadd.f32 %v509, %v510
        %v512 = vrot.slane %v511, 1
        %v513 = vadd.f32 %v511, %v512
        %v514 = vmul.f32 %v513, 0.00390625
        %s515 = scalar_lea.vmem %s1, 88
        %v516 = vld [vmem:[%s515] sm:$0xff]
        %v517 = vld [vmem:[%s515 + $0x8] sm:$0xff]
        %v518 = vld [vmem:[%s515 + $0x10] sm:$0xff]
        %v519 = vld [vmem:[%s515 + $0x18] sm:$0xff]
        %v520 = vld [vmem:[%s515 + $0x20] sm:$0xff]
        %v521 = vld [vmem:[%s515 + $0x28] sm:$0xff]
        %v522 = vld [vmem:[%s515 + $0x30] sm:$0xff]
        %v523 = vld [vmem:[%s515 + $0x38] sm:$0xff]
        %v524 = vld [vmem:[%s515 + $0x40] sm:$0xff]
        %v525 = vld [vmem:[%s515 + $0x48] sm:$0xff]
        %v526 = vld [vmem:[%s515 + $0x50] sm:$0x1]
        %v528 = vsel %vm330, %v514, 0
        %vm530 = vcmask 1040384
        %v532 = vsel %vm530, %v526, 0
        %534 = vmatpush.msra.mxu0 0.0
        %535 = vmatpush.msra.mxu0 0.0
        %536 = vmatpush.msra.mxu0 0.0
        %537 = vmatpush.msra.mxu0 0.0
        %538 = vmatpush.msra.mxu0 0.0
        %539 = vmatpush.msra.mxu0 %v532
        %540 = vmatpush.msra.mxu0 %v525
        %541 = vmatpush.msra.mxu0 %v524
        %542 = vmatpush.msra.mxu0 %v523
        %543 = vmatpush.msra.mxu0 %v522
        %544 = vmatpush.msra.mxu0 %v521
        %545 = vmatpush.msra.mxu0 %v520
        %546 = vmatpush.msra.mxu0 %v519
        %547 = vmatpush.msra.mxu0 %v518
        %548 = vmatpush.msra.mxu0 %v517
        %549 = vmatpush.msra.mxu0 %v516
        %550 = vmatmul.f32.gmra.mxu0 %v528
        %v551 = vpop.f32.mrf.mxu0
        %v552 = vadd.f32 0.0, %v551
        %553 = vdwg.mxu0
        %v555 = vsel %vm330, %v400, 0
        %v558 = vsel %vm530, %v411, 0
        %560 = vmatpush.msra.mxu0 0.0
        %561 = vmatpush.msra.mxu0 0.0
        %562 = vmatpush.msra.mxu0 0.0
        %563 = vmatpush.msra.mxu0 0.0
        %564 = vmatpush.msra.mxu0 0.0
        %565 = vmatpush.msra.mxu0 %v558
        %566 = vmatpush.msra.mxu0 %v410
        %567 = vmatpush.msra.mxu0 %v409
        %568 = vmatpush.msra.mxu0 %v408
        %569 = vmatpush.msra.mxu0 %v407
        %570 = vmatpush.msra.mxu0 %v406
        %571 = vmatpush.msra.mxu0 %v405
        %572 = vmatpush.msra.mxu0 %v404
        %573 = vmatpush.msra.mxu0 %v403
        %574 = vmatpush.msra.mxu0 %v402
        %575 = vmatpush.msra.mxu0 %v401
        %576 = vmatmul.f32.gmra.mxu0 %v555
        %v577 = vpop.f32.mrf.mxu0
        %v578 = vadd.f32 %v552, %v577
        %579 = vdwg.mxu0
        %s580 = scalar_lea.vmem %s267, 512 [#allocation2]
        %v581 = vld [vmem:[%s580] sm:$0xff]
        %v582 = vld [vmem:[%s580 + $0x8] sm:$0xff]
        %v583 = vld [vmem:[%s580 + $0x10] sm:$0xff]
        %v584 = vld [vmem:[%s580 + $0x18] sm:$0xff]
        %v585 = vld [vmem:[%s580 + $0x20] sm:$0xff]
        %v586 = vld [vmem:[%s580 + $0x28] sm:$0xff]
        %v587 = vld [vmem:[%s580 + $0x30] sm:$0xff]
        %v588 = vld [vmem:[%s580 + $0x38] sm:$0xff]
        %v589 = vld [vmem:[%s580 + $0x40] sm:$0xff]
        %v590 = vld [vmem:[%s580 + $0x48] sm:$0xff]
        %v591 = vld [vmem:[%s580 + $0x50] sm:$0xff]
        %v592 = vld [vmem:[%s580 + $0x58] sm:$0xff]
        %v593 = vld [vmem:[%s580 + $0x60] sm:$0xff]
        %v594 = vld [vmem:[%s580 + $0x68] sm:$0xff]
        %v595 = vld [vmem:[%s580 + $0x70] sm:$0xff]
        %v596 = vld [vmem:[%s580 + $0x78] sm:$0xff]
        %v597 = vld [vmem:[%s580 + $0x80] sm:$0xff]
        %v598 = vld [vmem:[%s580 + $0x88] sm:$0xff]
        %v599 = vld [vmem:[%s580 + $0x90] sm:$0xff]
        %v600 = vld [vmem:[%s580 + $0x98] sm:$0xff]
        %v601 = vld [vmem:[%s580 + $0xa0] sm:$0xff]
        %v602 = vld [vmem:[%s580 + $0xa8] sm:$0xff]
        %v603 = vld [vmem:[%s580 + $0xb0] sm:$0xff]
        %v604 = vld [vmem:[%s580 + $0xb8] sm:$0xff]
        %v605 = vld [vmem:[%s580 + $0xc0] sm:$0xff]
        %v606 = vld [vmem:[%s580 + $0xc8] sm:$0xff]
        %v607 = vld [vmem:[%s580 + $0xd0] sm:$0xff]
        %v608 = vld [vmem:[%s580 + $0xd8] sm:$0xff]
        %v609 = vld [vmem:[%s580 + $0xe0] sm:$0xff]
        %v610 = vld [vmem:[%s580 + $0xe8] sm:$0xff]
        %v611 = vld [vmem:[%s580 + $0xf0] sm:$0xff]
        %v612 = vld [vmem:[%s580 + $0xf8] sm:$0xff]
        %v613 = vsel %vm330, %v581, 0.0
        %v614 = vsel %vm330, %v582, 0.0
        %v615 = vadd.f32 %v613, %v614
        %v616 = vsel %vm330, %v583, 0.0
        %v617 = vadd.f32 %v615, %v616
        %v618 = vsel %vm330, %v584, 0.0
        %v619 = vadd.f32 %v617, %v618
        %v620 = vsel %vm330, %v585, 0.0
        %v621 = vadd.f32 %v619, %v620
        %v622 = vsel %vm330, %v586, 0.0
        %v623 = vadd.f32 %v621, %v622
        %v624 = vsel %vm330, %v587, 0.0
        %v625 = vadd.f32 %v623, %v624
        %v626 = vsel %vm330, %v588, 0.0
        %v627 = vadd.f32 %v625, %v626
        %v628 = vsel %vm330, %v589, 0.0
        %v629 = vadd.f32 %v627, %v628
        %v630 = vsel %vm330, %v590, 0.0
        %v631 = vadd.f32 %v629, %v630
        %v632 = vsel %vm330, %v591, 0.0
        %v633 = vadd.f32 %v631, %v632
        %v634 = vsel %vm330, %v592, 0.0
        %v635 = vadd.f32 %v633, %v634
        %v636 = vsel %vm330, %v593, 0.0
        %v637 = vadd.f32 %v635, %v636
        %v638 = vsel %vm330, %v594, 0.0
        %v639 = vadd.f32 %v637, %v638
        %v640 = vsel %vm330, %v595, 0.0
        %v641 = vadd.f32 %v639, %v640
        %v642 = vsel %vm330, %v596, 0.0
        %v643 = vadd.f32 %v641, %v642
        %v644 = vsel %vm330, %v597, 0.0
        %v645 = vadd.f32 %v643, %v644
        %v646 = vsel %vm330, %v598, 0.0
        %v647 = vadd.f32 %v645, %v646
        %v648 = vsel %vm330, %v599, 0.0
        %v649 = vadd.f32 %v647, %v648
        %v650 = vsel %vm330, %v600, 0.0
        %v651 = vadd.f32 %v649, %v650
        %v652 = vsel %vm330, %v601, 0.0
        %v653 = vadd.f32 %v651, %v652
        %v654 = vsel %vm330, %v602, 0.0
        %v655 = vadd.f32 %v653, %v654
        %v656 = vsel %vm330, %v603, 0.0
        %v657 = vadd.f32 %v655, %v656
        %v658 = vsel %vm330, %v604, 0.0
        %v659 = vadd.f32 %v657, %v658
        %v660 = vsel %vm330, %v605, 0.0
        %v661 = vadd.f32 %v659, %v660
        %v662 = vsel %vm330, %v606, 0.0
        %v663 = vadd.f32 %v661, %v662
        %v664 = vsel %vm330, %v607, 0.0
        %v665 = vadd.f32 %v663, %v664
        %v666 = vsel %vm330, %v608, 0.0
        %v667 = vadd.f32 %v665, %v666
        %v668 = vsel %vm330, %v609, 0.0
        %v669 = vadd.f32 %v667, %v668
        %v670 = vsel %vm330, %v610, 0.0
        %v671 = vadd.f32 %v669, %v670
        %v672 = vsel %vm330, %v611, 0.0
        %v673 = vadd.f32 %v671, %v672
        %v674 = vsel %vm330, %v612, 0.0
        %v675 = vadd.f32 %v673, %v674
        %v676 = vrot.slane %v675, 4
        %v677 = vadd.f32 %v675, %v676
        %v678 = vrot.slane %v677, 2
        %v679 = vadd.f32 %v677, %v678
        %v680 = vrot.slane %v679, 1
        %v681 = vadd.f32 %v679, %v680
        %v682 = vmul.f32 %v681, 0.00390625
        %s683 = scalar_lea.vmem %s1, 176
        %v684 = vld [vmem:[%s683] sm:$0xff]
        %v685 = vld [vmem:[%s683 + $0x8] sm:$0xff]
        %v686 = vld [vmem:[%s683 + $0x10] sm:$0xff]
        %v687 = vld [vmem:[%s683 + $0x18] sm:$0xff]
        %v688 = vld [vmem:[%s683 + $0x20] sm:$0xff]
        %v689 = vld [vmem:[%s683 + $0x28] sm:$0xff]
        %v690 = vld [vmem:[%s683 + $0x30] sm:$0xff]
        %v691 = vld [vmem:[%s683 + $0x38] sm:$0xff]
        %v692 = vld [vmem:[%s683 + $0x40] sm:$0xff]
        %v693 = vld [vmem:[%s683 + $0x48] sm:$0xff]
        %v694 = vld [vmem:[%s683 + $0x50] sm:$0x1]
        %v696 = vsel %vm330, %v682, 0
        %v699 = vsel %vm530, %v694, 0
        %701 = vmatpush.msra.mxu0 0.0
        %702 = vmatpush.msra.mxu0 0.0
        %703 = vmatpush.msra.mxu0 0.0
        %704 = vmatpush.msra.mxu0 0.0
        %705 = vmatpush.msra.mxu0 0.0
        %706 = vmatpush.msra.mxu0 %v699
        %707 = vmatpush.msra.mxu0 %v693
        %708 = vmatpush.msra.mxu0 %v692
        %709 = vmatpush.msra.mxu0 %v691
        %710 = vmatpush.msra.mxu0 %v690
        %711 = vmatpush.msra.mxu0 %v689
        %712 = vmatpush.msra.mxu0 %v688
        %713 = vmatpush.msra.mxu0 %v687
        %714 = vmatpush.msra.mxu0 %v686
        %715 = vmatpush.msra.mxu0 %v685
        %716 = vmatpush.msra.mxu0 %v684
        %717 = vmatmul.f32.gmra.mxu0 %v696
        %v718 = vpop.f32.mrf.mxu0
        %v719 = vadd.f32 0.0, %v718
        %720 = vdwg.mxu0
        %v721 = vadd.f32 %v578, %v719
        %s722 = scalar_lea.vmem %s267, 768 [#allocation2]
        %v723 = vld [vmem:[%s722] sm:$0xff]
        %v724 = vld [vmem:[%s722 + $0x8] sm:$0xff]
        %v725 = vld [vmem:[%s722 + $0x10] sm:$0xff]
        %v726 = vld [vmem:[%s722 + $0x18] sm:$0xff]
        %v727 = vld [vmem:[%s722 + $0x20] sm:$0xff]
        %v728 = vld [vmem:[%s722 + $0x28] sm:$0xff]
        %v729 = vld [vmem:[%s722 + $0x30] sm:$0xff]
        %v730 = vld [vmem:[%s722 + $0x38] sm:$0xff]
        %v731 = vld [vmem:[%s722 + $0x40] sm:$0xff]
        %v732 = vld [vmem:[%s722 + $0x48] sm:$0xff]
        %v733 = vld [vmem:[%s722 + $0x50] sm:$0xff]
        %v734 = vld [vmem:[%s722 + $0x58] sm:$0xff]
        %v735 = vld [vmem:[%s722 + $0x60] sm:$0xff]
        %v736 = vld [vmem:[%s722 + $0x68] sm:$0xff]
        %v737 = vld [vmem:[%s722 + $0x70] sm:$0xff]
        %v738 = vld [vmem:[%s722 + $0x78] sm:$0xff]
        %v739 = vld [vmem:[%s722 + $0x80] sm:$0xff]
        %v740 = vld [vmem:[%s722 + $0x88] sm:$0xff]
        %v741 = vld [vmem:[%s722 + $0x90] sm:$0xff]
        %v742 = vld [vmem:[%s722 + $0x98] sm:$0xff]
        %v743 = vld [vmem:[%s722 + $0xa0] sm:$0xff]
        %v744 = vld [vmem:[%s722 + $0xa8] sm:$0xff]
        %v745 = vld [vmem:[%s722 + $0xb0] sm:$0xff]
        %v746 = vld [vmem:[%s722 + $0xb8] sm:$0xff]
        %v747 = vld [vmem:[%s722 + $0xc0] sm:$0xff]
        %v748 = vld [vmem:[%s722 + $0xc8] sm:$0xff]
        %v749 = vld [vmem:[%s722 + $0xd0] sm:$0xff]
        %v750 = vld [vmem:[%s722 + $0xd8] sm:$0xff]
        %v751 = vld [vmem:[%s722 + $0xe0] sm:$0xff]
        %v752 = vld [vmem:[%s722 + $0xe8] sm:$0xff]
        %v753 = vld [vmem:[%s722 + $0xf0] sm:$0xff]
        %v754 = vld [vmem:[%s722 + $0xf8] sm:$0xff]
        %v755 = vsel %vm330, %v723, 0.0
        %v756 = vsel %vm330, %v724, 0.0
        %v757 = vadd.f32 %v755, %v756
        %v758 = vsel %vm330, %v725, 0.0
        %v759 = vadd.f32 %v757, %v758
        %v760 = vsel %vm330, %v726, 0.0
        %v761 = vadd.f32 %v759, %v760
        %v762 = vsel %vm330, %v727, 0.0
        %v763 = vadd.f32 %v761, %v762
        %v764 = vsel %vm330, %v728, 0.0
        %v765 = vadd.f32 %v763, %v764
        %v766 = vsel %vm330, %v729, 0.0
        %v767 = vadd.f32 %v765, %v766
        %v768 = vsel %vm330, %v730, 0.0
        %v769 = vadd.f32 %v767, %v768
        %v770 = vsel %vm330, %v731, 0.0
        %v771 = vadd.f32 %v769, %v770
        %v772 = vsel %vm330, %v732, 0.0
        %v773 = vadd.f32 %v771, %v772
        %v774 = vsel %vm330, %v733, 0.0
        %v775 = vadd.f32 %v773, %v774
        %v776 = vsel %vm330, %v734, 0.0
        %v777 = vadd.f32 %v775, %v776
        %v778 = vsel %vm330, %v735, 0.0
        %v779 = vadd.f32 %v777, %v778
        %v780 = vsel %vm330, %v736, 0.0
        %v781 = vadd.f32 %v779, %v780
        %v782 = vsel %vm330, %v737, 0.0
        %v783 = vadd.f32 %v781, %v782
        %v784 = vsel %vm330, %v738, 0.0
        %v785 = vadd.f32 %v783, %v784
        %v786 = vsel %vm330, %v739, 0.0
        %v787 = vadd.f32 %v785, %v786
        %v788 = vsel %vm330, %v740, 0.0
        %v789 = vadd.f32 %v787, %v788
        %v790 = vsel %vm330, %v741, 0.0
        %v791 = vadd.f32 %v789, %v790
        %v792 = vsel %vm330, %v742, 0.0
        %v793 = vadd.f32 %v791, %v792
        %v794 = vsel %vm330, %v743, 0.0
        %v795 = vadd.f32 %v793, %v794
        %v796 = vsel %vm330, %v744, 0.0
        %v797 = vadd.f32 %v795, %v796
        %v798 = vsel %vm330, %v745, 0.0
        %v799 = vadd.f32 %v797, %v798
        %v800 = vsel %vm330, %v746, 0.0
        %v801 = vadd.f32 %v799, %v800
        %v802 = vsel %vm330, %v747, 0.0
        %v803 = vadd.f32 %v801, %v802
        %v804 = vsel %vm330, %v748, 0.0
        %v805 = vadd.f32 %v803, %v804
        %v806 = vsel %vm330, %v749, 0.0
        %v807 = vadd.f32 %v805, %v806
        %v808 = vsel %vm330, %v750, 0.0
        %v809 = vadd.f32 %v807, %v808
        %v810 = vsel %vm330, %v751, 0.0
        %v811 = vadd.f32 %v809, %v810
        %v812 = vsel %vm330, %v752, 0.0
        %v813 = vadd.f32 %v811, %v812
        %v814 = vsel %vm330, %v753, 0.0
        %v815 = vadd.f32 %v813, %v814
        %v816 = vsel %vm330, %v754, 0.0
        %v817 = vadd.f32 %v815, %v816
        %v818 = vrot.slane %v817, 4
        %v819 = vadd.f32 %v817, %v818
        %v820 = vrot.slane %v819, 2
        %v821 = vadd.f32 %v819, %v820
        %v822 = vrot.slane %v821, 1
        %v823 = vadd.f32 %v821, %v822
        %v824 = vmul.f32 %v823, 0.00390625
        %s825 = scalar_lea.vmem %s1, 264
        %v826 = vld [vmem:[%s825] sm:$0xff]
        %v827 = vld [vmem:[%s825 + $0x8] sm:$0xff]
        %v828 = vld [vmem:[%s825 + $0x10] sm:$0xff]
        %v829 = vld [vmem:[%s825 + $0x18] sm:$0xff]
        %v830 = vld [vmem:[%s825 + $0x20] sm:$0xff]
        %v831 = vld [vmem:[%s825 + $0x28] sm:$0xff]
        %v832 = vld [vmem:[%s825 + $0x30] sm:$0xff]
        %v833 = vld [vmem:[%s825 + $0x38] sm:$0xff]
        %v834 = vld [vmem:[%s825 + $0x40] sm:$0xff]
        %v835 = vld [vmem:[%s825 + $0x48] sm:$0xff]
        %v836 = vld [vmem:[%s825 + $0x50] sm:$0x1]
        %v838 = vsel %vm330, %v824, 0
        %v841 = vsel %vm530, %v836, 0
        %843 = vmatpush.msra.mxu0 0.0
        %844 = vmatpush.msra.mxu0 0.0
        %845 = vmatpush.msra.mxu0 0.0
        %846 = vmatpush.msra.mxu0 0.0
        %847 = vmatpush.msra.mxu0 0.0
        %848 = vmatpush.msra.mxu0 %v841
        %849 = vmatpush.msra.mxu0 %v835
        %850 = vmatpush.msra.mxu0 %v834
        %851 = vmatpush.msra.mxu0 %v833
        %852 = vmatpush.msra.mxu0 %v832
        %853 = vmatpush.msra.mxu0 %v831
        %854 = vmatpush.msra.mxu0 %v830
        %855 = vmatpush.msra.mxu0 %v829
        %856 = vmatpush.msra.mxu0 %v828
        %857 = vmatpush.msra.mxu0 %v827
        %858 = vmatpush.msra.mxu0 %v826
        %859 = vmatmul.f32.gmra.mxu0 %v838
        %v860 = vpop.f32.mrf.mxu0
        %v861 = vadd.f32 0.0, %v860
        %862 = vdwg.mxu0
        %v863 = vadd.f32 %v721, %v861
        %v864 = vld [vmem:[%s2] sm:$0x1]
        %v865 = vmul.f32 %v863, %v864
        %v866 = vld [vmem:[%s3] sm:$0x1]
        %v867 = vadd.f32 %v865, %v866
        %v868 = vmax.f32 %v867, 0.0
        %v869 = vld [vmem:[%s4] sm:$0xff]
        %v870 = vld [vmem:[%s4 + $0x8] sm:$0xff]
        %v871 = vld [vmem:[%s4 + $0x10] sm:$0xff]
        %v872 = vld [vmem:[%s4 + $0x18] sm:$0xff]
        %v873 = vld [vmem:[%s4 + $0x20] sm:$0xff]
        %v874 = vld [vmem:[%s4 + $0x28] sm:$0xff]
        %v875 = vld [vmem:[%s4 + $0x30] sm:$0xff]
        %v876 = vld [vmem:[%s4 + $0x38] sm:$0xff]
        %vm877 = vcmask 523264
        %v879 = vsel %vm877, %v868, 0
        %881 = vmatpush.msra.mxu0 0.0
        %882 = vmatpush.msra.mxu0 0.0
        %883 = vmatpush.msra.mxu0 0.0
        %884 = vmatpush.msra.mxu0 0.0
        %885 = vmatpush.msra.mxu0 0.0
        %886 = vmatpush.msra.mxu0 0.0
        %887 = vmatpush.msra.mxu0 0.0
        %888 = vmatpush.msra.mxu0 0.0
        %889 = vmatpush.msra.mxu0 %v876
        %890 = vmatpush.msra.mxu0 %v875
        %891 = vmatpush.msra.mxu0 %v874
        %892 = vmatpush.msra.mxu0 %v873
        %893 = vmatpush.msra.mxu0 %v872
        %894 = vmatpush.msra.mxu0 %v871
        %895 = vmatpush.msra.mxu0 %v870
        %896 = vmatpush.msra.mxu0 %v869
        %897 = vmatmul.f32.gmra.mxu0 %v879
        %v898 = vpop.f32.mrf.mxu0
        %v899 = vadd.f32 0.0, %v898
        %900 = vdwg.mxu0
        %v901 = vld [vmem:[%s5] sm:$0x1]
        %v902 = vmul.f32 %v899, %v901
        %v903 = vld [vmem:[%s6] sm:$0x1]
        %v904 = vadd.f32 %v902, %v903
        %v905 = vand.u32 2147483647, %v904
        %v906 = vsub.f32 0.0, %v905
        %v907 = vmul.f32 %v906, 1.442695
        %v908 = vpow.pop %v907
        %vm909 = vcmp.ge.f32.partialorder %v904, 0.0
        %v910 = vadd.f32 %v908, 1.0
        %v911 = vrcp.pop %v910
        %v912 = vmul.f32 %v910, %v911
        %v913 = vsub.f32 1.0, %v912
        %v914 = vmul.f32 %v911, %v913
        %v915 = vadd.f32 %v911, %v914
        %vm916 = vweird.f32 %v910
        %vm917 = vweird.f32 %v911
        %vm918 = vmor %vm916, %vm917
        %v919 = vsel %vm918, %v911, %v915
        %v920 = vand.u32 2147483647, %v910
        %vm921 = vcmp.eq.f32.partialorder %v920, 8.507059e+37
        %v922 = vand.u32 %v910, 2147483648
        %v923 = vor.u32 1.1754944e-38, %v922
        %v924 = vsel %vm921, %v923, %v919
        %v925 = vmul.f32 1.0, %v924
        %v926 = vmul.f32 %v908, %v924
        %v927 = vsel %vm909, %v925, %v926
        %vm928 = vcmask 655360
        %929 = vst.msk [vmem:[%s297] sm:$0x1] %vm928, %v927
        %s930 = sand.u32 %s184, 1
        %s931 = scalar_lea.sflag [#allocation4], %s930
        %s932 = sand.u32 %s184, 1
        %s933 = scalar_lea.vmem [#allocation5], %s932
        // Predicated region
        $region53: #{view_attention_forward.1} parent=47 // pred_check
          %p934 = pneg %p194
        $region54: #{view_attention_forward.1} parent=47 // pred_check_branch
          %936 = sbr.rel (%p934) target = $region56
        $region55: #{view_attention_forward.1} parent=47 // pred_region
          %938 = vsyncadd %s931, 0
          %s939 = scalar_lea.hbm %s7, %s24
          %s941 = sshll.u32 %s933, 4
          %s942 = int_to_ptr.vmem [resolvable:$true] %s941
          %s943 = sshll.u32 %s939, 4
          %s944 = int_to_ptr.hbm [resolvable:$true] %s943
          %946 = dma.vmem_to_hbm [thread:$0]  %s942, 16, %s944, %s931
        $region56: #{view_attention_forward.1} parent=47 // pred_fallthru
          _
      $region48: #{view_attention_forward.1} parent=5 // pred_fallthru
        _
      %p947 = scmp.le.s32.totalorder 2, %s19
      // Predicated region
      $region57: #{view_attention_forward.1} parent=5 // pred_check
        %p948 = pneg %p947
      $region58: #{view_attention_forward.1} parent=5 // pred_check_branch
        %950 = sbr.rel (%p948) target = $region60
      $region59: #{view_attention_forward.1} parent=5 // pred_region
        %s951 = ssub.s32 %s19, 2
        // Predicated region
        $region61: #{view_attention_forward.1} parent=59 // pred_check
          %p952 = pneg %p200
        $region62: #{view_attention_forward.1} parent=59 // pred_check_branch
          %954 = sbr.rel (%p952) target = $region64
        $region63: #{view_attention_forward.1} parent=59 // pred_region
          %s955 = sand.u32 %s185, 1
          %s956 = scalar_lea.sflag [#allocation4], %s955
          %s957 = sand.u32 %s185, 1
          %s958 = scalar_lea.vmem [#allocation5], %s957
          %960 = dma.done %s956, 16
        $region64: #{view_attention_forward.1} parent=59 // pred_fallthru
          _
      $region60: #{view_attention_forward.1} parent=5 // pred_fallthru
        _
    $region6: #{view_attention_forward.1} parent=1 // loop_footer
      %s23 = sadd.s32 1, %s19
    $region7: #{view_attention_forward.1} parent=1 // loop_footer_branch
      %18 = sbr.rel target = $region3
    $region8: #{view_attention_forward.1} parent=1 // loop_exit
      _
    %961 = vsyncpa [#allocation3], 1
    %s962 = scalar_lea.sflag [#allocation3], 1
    %963 = vsyncpa %s962, 1
    %964 = vsyncpa [#allocation4], 1
    %s965 = scalar_lea.sflag [#allocation4], 1
    %966 = vsyncpa %s965, 1

</llo_original>
